<compile_context>
chip_gen: v6e
topology: v6e:2x2x1
jax: 0.10.0
libtpu: 0.0.40
codegen_flags: <defaults>
</compile_context>

<pallas_src>
import jax
import jax.numpy as jnp
from jax.experimental import pallas as pl
from jax.experimental.pallas import tpu as pltpu


def cbow_kernel(idx_ref, emb_ref, w_ref, out_ref, hid_ref, m_ref, l_ref):
    """Two-phase CBOW forward.

    Grid = (2, V // TILE_V):
      phase p == 0 : build hidden (once) and accumulate online logsumexp stats
                     (running max m, running sum-exp l) per vocab tile.
      phase p == 1 : recompute this tile's logits and write log-probabilities.

    idx_ref: VMEM (B, C) int32 token ids            (full, resident)
    emb_ref: VMEM (V, D) embedding table            (full, resident)
    w_ref:   VMEM (TILE_V, D) Linear weight tile    (PyTorch (out, in) layout)
    out_ref: VMEM (B, TILE_V) output tile
    hid_ref: VMEM (B, D) scratch: context-mean hidden state
    m_ref:   VMEM (B, 1) scratch: running max over vocab
    l_ref:   VMEM (B, 1) scratch: running sum of exp(logit - m)
    """
    p = pl.program_id(0)   # phase
    j = pl.program_id(1)   # vocab tile
    B, C = idx_ref.shape
    V = emb_ref.shape[0]

    # --- phase 0, first tile: gather + mean as a single MXU matmul ----------
    @pl.when(jnp.logical_and(p == 0, j == 0))
    def _():
        idx = idx_ref[...]                                        # (B, C) i32
        lane = jax.lax.broadcasted_iota(jnp.int32, (B, V), 1)     # vocab ids
        counts = jnp.zeros((B, V), jnp.float32)
        for c in range(C):            # C is small & static (unrolled); use
            counts += (idx[:, c:c + 1] == lane).astype(jnp.float32)  # lax.fori_loop if C grows
        hid_ref[...] = jnp.dot(counts, emb_ref[...],
                               preferred_element_type=jnp.float32) * (1.0 / C)
        m_ref[...] = jnp.full((B, 1), -jnp.inf, jnp.float32)
        l_ref[...] = jnp.zeros((B, 1), jnp.float32)

    # --- logits for this vocab tile: contract over D, no transpose ----------
    logits = jax.lax.dot_general(
        hid_ref[...], w_ref[...],
        dimension_numbers=(((1,), (1,)), ((), ())),
        preferred_element_type=jnp.float32)                       # (B, TILE_V)

    # --- phase 0: online logsumexp accumulation ------------------------------
    @pl.when(p == 0)
    def _():
        m_prev = m_ref[...]
        m_new = jnp.maximum(m_prev, jnp.max(logits, axis=-1, keepdims=True))
        l_ref[...] = (l_ref[...] * jnp.exp(m_prev - m_new)
                      + jnp.sum(jnp.exp(logits - m_new), axis=-1, keepdims=True))
        m_ref[...] = m_new
        out_ref[...] = logits      # placeholder; block is rewritten in phase 1

    # --- phase 1: emit log-probabilities -------------------------------------
    @pl.when(p == 1)
    def _():
        out_ref[...] = logits - m_ref[...] - jnp.log(l_ref[...])


def cbow_forward(inputs, embedding_table, output_weight, *, tile_v=128):
    """inputs: (B, C) int32; embedding_table: (V, D); output_weight: (V, D)."""
    B, C = inputs.shape
    V, D = embedding_table.shape
    assert output_weight.shape == (V, D)
    tile_v = min(tile_v, V)
    # TODO(synk): for V not a multiple of tile_v, pad W/out in the wrapper and
    # mask padded lanes to -inf before the logsumexp.
    assert V % tile_v == 0, "vocab size must be a multiple of the vocab tile"
    n_v = V // tile_v

    return pl.pallas_call(
        cbow_kernel,
        out_shape=jax.ShapeDtypeStruct((B, V), jnp.float32),
        grid_spec=pltpu.PrefetchScalarGridSpec(
            num_scalar_prefetch=0,
            grid=(2, n_v),   # (phase, vocab tile)
            in_specs=[
                pl.BlockSpec((B, C), lambda p, j: (0, 0)),        # token ids (resident)
                pl.BlockSpec((V, D), lambda p, j: (0, 0)),        # embedding table (resident)
                pl.BlockSpec((tile_v, D), lambda p, j: (j, 0)),   # W tile (pipelined)
            ],
            out_specs=pl.BlockSpec((B, tile_v), lambda p, j: (0, j)),
            scratch_shapes=[
                pltpu.VMEM((B, D), jnp.float32),   # hidden
                pltpu.VMEM((B, 1), jnp.float32),   # running max
                pltpu.VMEM((B, 1), jnp.float32),   # running sum-exp
            ],
        ),
        compiler_params=pltpu.CompilerParams(
            # Online-logsumexp scratch makes both axes sequential reductions.
            dimension_semantics=("arbitrary", "arbitrary"),
            vmem_limit_bytes=32 * 1024 * 1024,
        ),
    )(inputs, embedding_table, output_weight)


def reference_forward(inputs, embedding_table, output_weight):
    embeds = embedding_table[inputs]                       # (B, C, D)
    hidden = embeds.mean(axis=1)                           # (B, D)
    logits = hidden @ output_weight.T                      # (B, V)
    return jax.nn.log_softmax(logits, axis=1)


if __name__ == "__main__":
    VOCAB = 128      # vocab_size
    DIM = 32         # embedding_dim
    BATCH = 8
    CONTEXT = 4      # context window length

    key = jax.random.PRNGKey(0)
    k_emb, k_w, k_idx = jax.random.split(key, 3)

    # nn.Embedding default init: N(0, 1)
    embedding_table = jax.random.normal(k_emb, (VOCAB, DIM), dtype=jnp.float32)
    # nn.Linear(embedding_dim, vocab_size, bias=False): U(-1/sqrt(D), 1/sqrt(D)),
    # stored as (out_features, in_features) = (VOCAB, DIM)
    bound = 1.0 / (DIM ** 0.5)
    output_weight = jax.random.uniform(
        k_w, (VOCAB, DIM), minval=-bound, maxval=bound, dtype=jnp.float32)

    inputs = jax.random.randint(k_idx, (BATCH, CONTEXT), 0, VOCAB, dtype=jnp.int32)

    log_probs = cbow_forward(inputs, embedding_table, output_weight)
    log_probs = jax.block_until_ready(log_probs)

    ref = reference_forward(inputs, embedding_table, output_weight)
    # Slightly relaxed tolerance: the gather-as-matmul runs through the MXU
    # (bf16x3 f32 emulation) instead of exact f32 adds.
    if not jnp.allclose(log_probs, ref, atol=1e-4, rtol=1e-4):
        raise AssertionError("Pallas kernel output mismatch vs reference")

    print("KERNEL_OK")
</pallas_src>

<mosaic_0001>
module attributes {stable_mosaic.version = 11 : i64} {
  func.func @cbow_kernel(%arg0: i32, %arg1: i32, %arg2: memref<8x4xi32, #tpu.memory_space<vmem>>, %arg3: memref<128x32xf32, #tpu.memory_space<vmem>>, %arg4: memref<128x32xf32, #tpu.memory_space<vmem>>, %arg5: memref<8x128xf32, #tpu.memory_space<vmem>>, %arg6: memref<8x32xf32, #tpu.memory_space<vmem>>, %arg7: memref<8x1xf32, #tpu.memory_space<vmem>>, %arg8: memref<8x1xf32, #tpu.memory_space<vmem>>) attributes {dimension_semantics = [#tpu.dimension_semantics<arbitrary>, #tpu.dimension_semantics<arbitrary>], iteration_bounds = array<i64: 2, 1>, scalar_prefetch = 0 : i64, scratch_operands = 3 : i64, tpu.core_type = #tpu.core_type<tc>, window_params = [{pipeline_mode = #tpu.pipeline_mode<synchronous>, transform_indices = @transform_0, window_bounds = array<i64: 8, 4>}, {pipeline_mode = #tpu.pipeline_mode<synchronous>, transform_indices = @transform_1, window_bounds = array<i64: 128, 32>}, {transform_indices = @transform_2, window_bounds = array<i64: 128, 32>}, {transform_indices = @transform_3, window_bounds = array<i64: 8, 128>}]} {
    %c0_i32 = arith.constant 0 : i32
    %0 = arith.cmpi eq, %arg0, %c0_i32 : i32
    %c0_i32_0 = arith.constant 0 : i32
    %1 = arith.cmpi eq, %arg1, %c0_i32_0 : i32
    %2 = arith.andi %0, %1 : i1
    %3 = arith.extui %2 : i1 to i32
    %c0_i32_1 = arith.constant 0 : i32
    %4 = arith.cmpi ne, %3, %c0_i32_1 : i32
    scf.if %4 {
      %c0_8 = arith.constant 0 : index
      %c0_9 = arith.constant 0 : index
      %14 = vector.load %arg2[%c0_8, %c0_9] : memref<8x4xi32, #tpu.memory_space<vmem>>, vector<8x4xi32>
      %15 = tpu.iota {dimensions = array<i32: 1>} : vector<8x128xi32>
      %cst_10 = arith.constant 0.000000e+00 : f32
      %16 = vector.broadcast %cst_10 : f32 to vector<8x128xf32>
      %17 = vector.extract_strided_slice %14 {offsets = [0, 0], sizes = [8, 1], strides = [1, 1]} : vector<8x4xi32> to vector<8x1xi32>
      %18 = vector.broadcast %17 : vector<8x1xi32> to vector<8x128xi32>
      %19 = arith.cmpi eq, %18, %15 : vector<8x128xi32>
      %20 = arith.extui %19 : vector<8x128xi1> to vector<8x128xi32>
      %21 = arith.sitofp %20 : vector<8x128xi32> to vector<8x128xf32>
      %22 = arith.addf %16, %21 : vector<8x128xf32>
      %23 = vector.extract_strided_slice %14 {offsets = [0, 1], sizes = [8, 1], strides = [1, 1]} : vector<8x4xi32> to vector<8x1xi32>
      %24 = vector.broadcast %23 : vector<8x1xi32> to vector<8x128xi32>
      %25 = arith.cmpi eq, %24, %15 : vector<8x128xi32>
      %26 = arith.extui %25 : vector<8x128xi1> to vector<8x128xi32>
      %27 = arith.sitofp %26 : vector<8x128xi32> to vector<8x128xf32>
      %28 = arith.addf %22, %27 : vector<8x128xf32>
      %29 = vector.extract_strided_slice %14 {offsets = [0, 2], sizes = [8, 1], strides = [1, 1]} : vector<8x4xi32> to vector<8x1xi32>
      %30 = vector.broadcast %29 : vector<8x1xi32> to vector<8x128xi32>
      %31 = arith.cmpi eq, %30, %15 : vector<8x128xi32>
      %32 = arith.extui %31 : vector<8x128xi1> to vector<8x128xi32>
      %33 = arith.sitofp %32 : vector<8x128xi32> to vector<8x128xf32>
      %34 = arith.addf %28, %33 : vector<8x128xf32>
      %35 = vector.extract_strided_slice %14 {offsets = [0, 3], sizes = [8, 1], strides = [1, 1]} : vector<8x4xi32> to vector<8x1xi32>
      %36 = vector.broadcast %35 : vector<8x1xi32> to vector<8x128xi32>
      %37 = arith.cmpi eq, %36, %15 : vector<8x128xi32>
      %38 = arith.extui %37 : vector<8x128xi1> to vector<8x128xi32>
      %39 = arith.sitofp %38 : vector<8x128xi32> to vector<8x128xf32>
      %40 = arith.addf %34, %39 : vector<8x128xf32>
      %c0_11 = arith.constant 0 : index
      %c0_12 = arith.constant 0 : index
      %41 = vector.load %arg3[%c0_11, %c0_12] : memref<128x32xf32, #tpu.memory_space<vmem>>, vector<128x32xf32>
      %cst_13 = arith.constant dense<0.000000e+00> : vector<8x32xf32>
      %42 = tpu.matmul %40, %41, %cst_13 {dimension_numbers = #tpu.dot_dimension_numbers<[1], [0], [0], [1], [0, 0, 1, 1], [], []>} : vector<8x128xf32>, vector<128x32xf32>, vector<8x32xf32> -> vector<8x32xf32>
      %cst_14 = arith.constant 2.500000e-01 : f32
      %43 = vector.broadcast %cst_14 : f32 to vector<8x32xf32>
      %44 = arith.mulf %42, %43 : vector<8x32xf32>
      %c0_15 = arith.constant 0 : index
      %c0_16 = arith.constant 0 : index
      %45 = vector.load %arg6[%c0_15, %c0_16] : memref<8x32xf32, #tpu.memory_space<vmem>>, vector<8x32xf32>
      tpu.vector_store %arg6[%c0_15, %c0_16], %44 {strides = array<i32>} : memref<8x32xf32, #tpu.memory_space<vmem>>, vector<8x32xf32>,
      %cst_17 = arith.constant 0xFF800000 : f32
      %46 = vector.broadcast %cst_17 : f32 to vector<8x1xf32>
      %c0_18 = arith.constant 0 : index
      %c0_19 = arith.constant 0 : index
      %47 = vector.load %arg7[%c0_18, %c0_19] : memref<8x1xf32, #tpu.memory_space<vmem>>, vector<8x1xf32>
      tpu.vector_store %arg7[%c0_18, %c0_19], %46 {strides = array<i32>} : memref<8x1xf32, #tpu.memory_space<vmem>>, vector<8x1xf32>,
      %cst_20 = arith.constant 0.000000e+00 : f32
      %48 = vector.broadcast %cst_20 : f32 to vector<8x1xf32>
      %c0_21 = arith.constant 0 : index
      %c0_22 = arith.constant 0 : index
      %49 = vector.load %arg8[%c0_21, %c0_22] : memref<8x1xf32, #tpu.memory_space<vmem>>, vector<8x1xf32>
      tpu.vector_store %arg8[%c0_21, %c0_22], %48 {strides = array<i32>} : memref<8x1xf32, #tpu.memory_space<vmem>>, vector<8x1xf32>,
    } else {
    }
    %c0 = arith.constant 0 : index
    %c0_2 = arith.constant 0 : index
    %5 = vector.load %arg6[%c0, %c0_2] : memref<8x32xf32, #tpu.memory_space<vmem>>, vector<8x32xf32>
    %c0_3 = arith.constant 0 : index
    %c0_4 = arith.constant 0 : index
    %6 = vector.load %arg4[%c0_3, %c0_4] : memref<128x32xf32, #tpu.memory_space<vmem>>, vector<128x32xf32>
    %cst = arith.constant dense<0.000000e+00> : vector<8x128xf32>
    %7 = tpu.matmul %5, %6, %cst {dimension_numbers = #tpu.dot_dimension_numbers<[1], [1], [0], [0], [0, 0, 1, 0], [], []>} : vector<8x32xf32>, vector<128x32xf32>, vector<8x128xf32> -> vector<8x128xf32>
    %c0_i32_5 = arith.constant 0 : i32
    %8 = arith.cmpi eq, %arg0, %c0_i32_5 : i32
    %9 = arith.extui %8 : i1 to i32
    %c0_i32_6 = arith.constant 0 : i32
    %10 = arith.cmpi ne, %9, %c0_i32_6 : i32
    scf.if %10 {
      %c0_8 = arith.constant 0 : index
      %c0_9 = arith.constant 0 : index
      %14 = vector.load %arg7[%c0_8, %c0_9] : memref<8x1xf32, #tpu.memory_space<vmem>>, vector<8x1xf32>
      %cst_10 = arith.constant dense<0xFF800000> : vector<8xf32>
      %15 = vector.multi_reduction <maximumf>, %7, %cst_10 [1] : vector<8x128xf32> to vector<8xf32>
      %16 = vector.shape_cast %15 : vector<8xf32> to vector<8x1xf32>
      %17 = arith.maximumf %14, %16 : vector<8x1xf32>
      %c0_11 = arith.constant 0 : index
      %c0_12 = arith.constant 0 : index
      %18 = vector.load %arg8[%c0_11, %c0_12] : memref<8x1xf32, #tpu.memory_space<vmem>>, vector<8x1xf32>
      %19 = arith.subf %14, %17 : vector<8x1xf32>
      %20 = math.exp %19 : vector<8x1xf32>
      %21 = arith.mulf %18, %20 : vector<8x1xf32>
      %22 = vector.broadcast %17 : vector<8x1xf32> to vector<8x128xf32>
      %23 = arith.subf %7, %22 : vector<8x128xf32>
      %24 = math.exp %23 : vector<8x128xf32>
      %cst_13 = arith.constant dense<0.000000e+00> : vector<8xf32>
      %25 = vector.multi_reduction <add>, %24, %cst_13 [1] : vector<8x128xf32> to vector<8xf32>
      %26 = vector.shape_cast %25 : vector<8xf32> to vector<8x1xf32>
      %27 = arith.addf %21, %26 : vector<8x1xf32>
      %c0_14 = arith.constant 0 : index
      %c0_15 = arith.constant 0 : index
      %28 = vector.load %arg8[%c0_14, %c0_15] : memref<8x1xf32, #tpu.memory_space<vmem>>, vector<8x1xf32>
      tpu.vector_store %arg8[%c0_14, %c0_15], %27 {strides = array<i32>} : memref<8x1xf32, #tpu.memory_space<vmem>>, vector<8x1xf32>,
      %c0_16 = arith.constant 0 : index
      %c0_17 = arith.constant 0 : index
      %29 = vector.load %arg7[%c0_16, %c0_17] : memref<8x1xf32, #tpu.memory_space<vmem>>, vector<8x1xf32>
      tpu.vector_store %arg7[%c0_16, %c0_17], %17 {strides = array<i32>} : memref<8x1xf32, #tpu.memory_space<vmem>>, vector<8x1xf32>,
      %c0_18 = arith.constant 0 : index
      %c0_19 = arith.constant 0 : index
      %30 = vector.load %arg5[%c0_18, %c0_19] : memref<8x128xf32, #tpu.memory_space<vmem>>, vector<8x128xf32>
      tpu.vector_store %arg5[%c0_18, %c0_19], %7 {strides = array<i32>} : memref<8x128xf32, #tpu.memory_space<vmem>>, vector<8x128xf32>,
    } else {
    }
    %c1_i32 = arith.constant 1 : i32
    %11 = arith.cmpi eq, %arg0, %c1_i32 : i32
    %12 = arith.extui %11 : i1 to i32
    %c0_i32_7 = arith.constant 0 : i32
    %13 = arith.cmpi ne, %12, %c0_i32_7 : i32
    scf.if %13 {
      %c0_8 = arith.constant 0 : index
      %c0_9 = arith.constant 0 : index
      %14 = vector.load %arg7[%c0_8, %c0_9] : memref<8x1xf32, #tpu.memory_space<vmem>>, vector<8x1xf32>
      %15 = vector.broadcast %14 : vector<8x1xf32> to vector<8x128xf32>
      %16 = arith.subf %7, %15 : vector<8x128xf32>
      %c0_10 = arith.constant 0 : index
      %c0_11 = arith.constant 0 : index
      %17 = vector.load %arg8[%c0_10, %c0_11] : memref<8x1xf32, #tpu.memory_space<vmem>>, vector<8x1xf32>
      %18 = math.log %17 : vector<8x1xf32>
      %19 = vector.broadcast %18 : vector<8x1xf32> to vector<8x128xf32>
      %20 = arith.subf %16, %19 : vector<8x128xf32>
      %c0_12 = arith.constant 0 : index
      %c0_13 = arith.constant 0 : index
      %21 = vector.load %arg5[%c0_12, %c0_13] : memref<8x128xf32, #tpu.memory_space<vmem>>, vector<8x128xf32>
      tpu.vector_store %arg5[%c0_12, %c0_13], %20 {strides = array<i32>} : memref<8x128xf32, #tpu.memory_space<vmem>>, vector<8x128xf32>,
    } else {
    }
    return
  }
  func.func @transform_0(%arg0: i32, %arg1: i32) -> (i32, i32) {
    %c0_i32 = arith.constant 0 : i32
    %c0_i32_0 = arith.constant 0 : i32
    %c0_i32_1 = arith.constant 0 : i32
    return %c0_i32, %c0_i32_0 : i32, i32
  }
  func.func @transform_1(%arg0: i32, %arg1: i32) -> (i32, i32) {
    %c0_i32 = arith.constant 0 : i32
    %c0_i32_0 = arith.constant 0 : i32
    %c0_i32_1 = arith.constant 0 : i32
    return %c0_i32, %c0_i32_0 : i32, i32
  }
  func.func @transform_2(%arg0: i32, %arg1: i32) -> (i32, i32) {
    %c0_i32 = arith.constant 0 : i32
    %c0_i32_0 = arith.constant 0 : i32
    return %arg1, %c0_i32 : i32, i32
  }
  func.func @transform_3(%arg0: i32, %arg1: i32) -> (i32, i32) {
    %c0_i32 = arith.constant 0 : i32
    %c0_i32_0 = arith.constant 0 : i32
    return %c0_i32, %arg1 : i32, i32
  }
}

</mosaic_0001>

<llo_original>
// kernel: tpu_custom_call.1
$region0: #{tpu_custom_call.1}
  #allocation0 [shape = 'u32[]', space=smem, size = 0x4, offset = 0x4, fixed_abs, tag = 'smem constant byte address 0x4 - core index']
  #allocation1 [shape = 'u32[144,128]{1,0:T(1,128)}', space=vmem, size = 0x12000, scoped, tag = 'internal scratch']
  #allocation2 [shape = 'f32[8,32]{1,0:T(8,128)}', space=vmem, size = 0x1000, scoped, tag = 'scratch operand']
  #allocation3 [shape = 'f32[8,1]{1,0:T(8,128)}', space=vmem, size = 0x1000, scoped, tag = 'scratch operand']
  #allocation4 [shape = 'f32[8,1]{1,0:T(8,128)}', space=vmem, size = 0x1000, scoped, tag = 'scratch operand']
  %s0 = inlined_call_operand.vmem [shape: s32[8,4], index: 0, kind: input, shape index: {}]
  %s1 = inlined_call_operand.vmem [shape: f32[128,32], index: 1, kind: input, shape index: {}]
  %s2 = inlined_call_operand.vmem [shape: f32[128,32], index: 2, kind: input, shape index: {}]
  %s3 = inlined_call_operand.hbm [shape: f32[8,128], index: 3, kind: output, shape index: {}]
  %s4 = sld [smem:[#allocation0]]
  $region57: #{tpu_custom_call.1} parent=0
    _
  %s6 = ssub.s32 1, %s4
  %s7 = scalar_select 0, %s6, %s4
  $region1: #{tpu_custom_call.1} parent=0
    #allocation5 [shape = 'u8[4096]{0}', space=vmem, size = 0x1000, scoped, tag = 'output window, operand 0, single buffered']
    #allocation6 [shape = 's32[2]{0}', space=sflag, size = 0x8, scoped, tag = 'scoped memory for tpu_custom_call.1']
    %8 = vsyncpa [#allocation6], 0
    loop: start=0, step=1, limit=4
    $region2: #{tpu_custom_call.1} parent=1 // loop_pre_header
      _
    $region3: #{tpu_custom_call.1} parent=1 // loop_header
      %s10 = sphi 0, %s14
      %p11 = scmp.ge.s32.totalorder %s10, 4
      %s17 = sphi 0, %s29
      %s18 = sphi 0, %s25
      %s19 = sphi 0, %s17
      %s20 = sphi 0, %s18
      %s21 = sphi 0, %s19
      %s22 = sphi 0, %s20
      %s30 = sphi 0, %s30
      %s32 = sphi 0, %s30
      %s33 = sphi 0, %s32
      %s47 = sphi 0, %s33
      %s51 = sphi 0, %s51
      %s53 = sphi 0, %s51
      %s54 = sphi 0, %s53
      %s68 = sphi 0, %s54
      %s74 = sphi 0, %s76
      %s77 = sphi 0, %s74
      %s78 = sphi 0, %s77
      %s94 = sphi 0, %s78
      %s100 = sphi 0, %s102
      %s103 = sphi 0, %s100
      %s104 = sphi 0, %s103
      %s120 = sphi 0, %s104
    $region4: #{tpu_custom_call.1} parent=1 // loop_header_branch
      %13 = sbr.rel (%p11) target = $region8
    $region5: #{tpu_custom_call.1} parent=1 // loop_body
      %s15 = ssub.s32 %s10, 1
      %s16 = ssub.s32 %s10, 2
      %s23 = sadd.s32 1, %s18
      %p24 = scmp.ge.s32.totalorder %s23, 1
      %s25 = scalar_select %p24, 0, %s23
      %s26 = sadd.s32 1, %s17
      %s27 = scalar_select %p24, %s26, %s17
      %p28 = scmp.ge.s32.totalorder %s27, 2
      %s29 = scalar_select %p28, 0, %s27
      %s31 = sadd.s32 %s30, 1
      %p34 = scmp.eq.s32.totalorder %s10, 1
      %p35 = scmp.ne.s32.totalorder %s30, %s32
      %p36 = scmp.eq.s32.totalorder %s10, 0
      %p37 = por %p35, %p36
      %p38 = scmp.ne.s32.totalorder %s30, %s32
      %p39 = scmp.eq.s32.totalorder %s15, 1
      %p40 = por %p38, %p39
      %p41 = scmp.ne.s32.totalorder %s32, %s33
      %p42 = scmp.eq.s32.totalorder %s15, 0
      %p43 = por %p41, %p42
      %p44 = scmp.ne.s32.totalorder %s32, %s33
      %p45 = scmp.eq.s32.totalorder %s16, 1
      %p46 = por %p44, %p45
      %p48 = scmp.ne.s32.totalorder %s33, %s47
      %p49 = scmp.eq.s32.totalorder %s16, 0
      %p50 = por %p48, %p49
      %s52 = sadd.s32 %s51, 1
      %p55 = scmp.eq.s32.totalorder %s10, 1
      %p56 = scmp.ne.s32.totalorder %s51, %s53
      %p57 = scmp.eq.s32.totalorder %s10, 0
      %p58 = por %p56, %p57
      %p59 = scmp.ne.s32.totalorder %s51, %s53
      %p60 = scmp.eq.s32.totalorder %s15, 1
      %p61 = por %p59, %p60
      %p62 = scmp.ne.s32.totalorder %s53, %s54
      %p63 = scmp.eq.s32.totalorder %s15, 0
      %p64 = por %p62, %p63
      %p65 = scmp.ne.s32.totalorder %s53, %s54
      %p66 = scmp.eq.s32.totalorder %s16, 1
      %p67 = por %p65, %p66
      %p69 = scmp.ne.s32.totalorder %s54, %s68
      %p70 = scmp.eq.s32.totalorder %s16, 0
      %p71 = por %p69, %p70
      %s72 = ssub.s32 %s18, %s25
      %p73 = scmp.eq.s32.totalorder %s72, 0
      %s75 = sadd.s32 %s74, 1
      %s76 = scalar_select %p73, %s74, %s75
      %p79 = pneg %p73
      %p80 = scmp.eq.s32.totalorder %s10, 1
      %p81 = por %p79, %p80
      %p82 = scmp.ne.s32.totalorder %s74, %s77
      %p83 = scmp.eq.s32.totalorder %s10, 0
      %p84 = por %p82, %p83
      %p85 = scmp.ne.s32.totalorder %s74, %s77
      %p86 = scmp.eq.s32.totalorder %s15, 1
      %p87 = por %p85, %p86
      %p88 = scmp.ne.s32.totalorder %s77, %s78
      %p89 = scmp.eq.s32.totalorder %s15, 0
      %p90 = por %p88, %p89
      %p91 = scmp.ne.s32.totalorder %s77, %s78
      %p92 = scmp.eq.s32.totalorder %s16, 1
      %p93 = por %p91, %p92
      %p95 = scmp.ne.s32.totalorder %s78, %s94
      %p96 = scmp.eq.s32.totalorder %s16, 0
      %p97 = por %p95, %p96
      %s98 = ssub.s32 %s18, %s25
      %p99 = scmp.eq.s32.totalorder %s98, 0
      %s101 = sadd.s32 %s100, 1
      %s102 = scalar_select %p99, %s100, %s101
      %p105 = pneg %p99
      %p106 = scmp.eq.s32.totalorder %s10, 1
      %p107 = por %p105, %p106
      %p108 = scmp.ne.s32.totalorder %s100, %s103
      %p109 = scmp.eq.s32.totalorder %s10, 0
      %p110 = por %p108, %p109
      %p111 = scmp.ne.s32.totalorder %s100, %s103
      %p112 = scmp.eq.s32.totalorder %s15, 1
      %p113 = por %p111, %p112
      %p114 = scmp.ne.s32.totalorder %s103, %s104
      %p115 = scmp.eq.s32.totalorder %s15, 0
      %p116 = por %p114, %p115
      %p117 = scmp.ne.s32.totalorder %s103, %s104
      %p118 = scmp.eq.s32.totalorder %s16, 1
      %p119 = por %p117, %p118
      %p121 = scmp.ne.s32.totalorder %s104, %s120
      %p122 = scmp.eq.s32.totalorder %s16, 0
      %p123 = por %p121, %p122
      %p124 = scmp.le.s32.totalorder 1, %s10
      %p125 = scmp.lt.s32.totalorder %s10, 3
      %p126 = pnand %p124, %p125
      %p127 = pneg %p126
      // Predicated region
      $region9: #{tpu_custom_call.1} parent=5 // pred_check
        _
      $region10: #{tpu_custom_call.1} parent=5 // pred_check_branch
        %129 = sbr.rel (%p126) target = $region12
      $region11: #{tpu_custom_call.1} parent=5 // pred_region
        %s130 = ssub.s32 %s10, 1
        // Predicated region
        $region13: #{tpu_custom_call.1} parent=11 // pred_check
          %p131 = pneg %p43
        $region14: #{tpu_custom_call.1} parent=11 // pred_check_branch
          %133 = sbr.rel (%p131) target = $region16
        $region15: #{tpu_custom_call.1} parent=11 // pred_region
          _
        $region16: #{tpu_custom_call.1} parent=11 // pred_fallthru
          _
        // Predicated region
        $region17: #{tpu_custom_call.1} parent=11 // pred_check
          %p134 = pneg %p64
        $region18: #{tpu_custom_call.1} parent=11 // pred_check_branch
          %136 = sbr.rel (%p134) target = $region20
        $region19: #{tpu_custom_call.1} parent=11 // pred_region
          _
        $region20: #{tpu_custom_call.1} parent=11 // pred_fallthru
          _
        // Predicated region
        $region21: #{tpu_custom_call.1} parent=11 // pred_check
          %p137 = pneg %p90
        $region22: #{tpu_custom_call.1} parent=11 // pred_check_branch
          %139 = sbr.rel (%p137) target = $region24
        $region23: #{tpu_custom_call.1} parent=11 // pred_region
          %s140 = smul.u32 16, %s20
          %p141 = scmp.lt.s32.totalorder %s140, 15
          %s142 = scalar_select %p141, %s140, 15
          %s143 = smul.addr %s142, 8
          %s144 = scalar_lea.vmem %s2, %s143
          %s145 = smul.u32 16, %s20
        $region24: #{tpu_custom_call.1} parent=11 // pred_fallthru
          _
      $region12: #{tpu_custom_call.1} parent=5 // pred_fallthru
        _
      %p146 = scmp.lt.s32.totalorder %s10, 2
      // Predicated region
      $region25: #{tpu_custom_call.1} parent=5 // pred_check
        %p147 = pneg %p146
      $region26: #{tpu_custom_call.1} parent=5 // pred_check_branch
        %149 = sbr.rel (%p147) target = $region28
      $region27: #{tpu_custom_call.1} parent=5 // pred_region
        _
      $region28: #{tpu_custom_call.1} parent=5 // pred_fallthru
        _
      %p150 = scmp.le.s32.totalorder 1, %s10
      %p151 = scmp.lt.s32.totalorder %s10, 3
      %p152 = pnand %p150, %p151
      %p153 = pneg %p152
      // Predicated region
      $region29: #{tpu_custom_call.1} parent=5 // pred_check
        _
      $region30: #{tpu_custom_call.1} parent=5 // pred_check_branch
        %155 = sbr.rel (%p152) target = $region32
      $region31: #{tpu_custom_call.1} parent=5 // pred_region
        %s156 = ssub.s32 %s10, 1
        %p157 = pneg %p43
        %p158 = pneg %p40
        %p159 = pneg %p64
        %p160 = pneg %p61
        %s161 = smul.u32 16, %s20
        %p162 = scmp.lt.s32.totalorder %s161, 15
        %s163 = scalar_select %p162, %s161, 15
        %s164 = smul.addr %s163, 8
        %s165 = scalar_lea.vmem %s2, %s164
        %p166 = pneg %p90
        %p167 = pneg %p87
        %p168 = pneg %p116
        %p169 = pneg %p113
        %s170 = smul.u32 16, %s20
        %p171 = scmp.lt.s32.totalorder %s170, 15
        %s172 = scalar_select %p171, %s170, 15
        %s173 = smul.addr %s172, 8
        %s174 = scalar_lea.vmem %s2, %s173
        %s175 = smul.u32 16, %s20
        %p176 = scmp.eq.s32.totalorder %s19, 0
        %p177 = scmp.eq.s32.totalorder %s20, 0
        %p178 = pnand %p176, %p177
        %p179 = pneg %p178
        // Predicated region
        $region33: #{tpu_custom_call.1} parent=31 // pred_check
          _
        $region34: #{tpu_custom_call.1} parent=31 // pred_check_branch
          %181 = sbr.rel (%p178) target = $region36
        $region35: #{tpu_custom_call.1} parent=31 // pred_region
          %v182 = vld [vmem:[%s0] sm:$0xff]
          %v183 = vlaneseq
          %v184 = vand.u32 %v183, 127
          %185 = vset.pattern.permute.xlu0 0
          %186 = vperm.xlu0 %185, %v182
          %v187 = vpop.permute.xlu0 %186
          %vm188 = vcmp.eq.s32.totalorder %v187, %v184
          %v189 = vsel %vm188, 1, 0
          %v190 = vcvt.s32.f32 %v189
          %v191 = vadd.f32 %v190, 0.0
          %192 = vset.pattern.permute.xlu0 1
          %193 = vperm.xlu0 %192, %v182
          %v194 = vpop.permute.xlu0 %193
          %vm195 = vcmp.eq.s32.totalorder %v194, %v184
          %v196 = vsel %vm195, 1, 0
          %v197 = vcvt.s32.f32 %v196
          %v198 = vadd.f32 %v191, %v197
          %199 = vset.pattern.permute.xlu0 2
          %200 = vperm.xlu0 %199, %v182
          %v201 = vpop.permute.xlu0 %200
          %vm202 = vcmp.eq.s32.totalorder %v201, %v184
          %v203 = vsel %vm202, 1, 0
          %v204 = vcvt.s32.f32 %v203
          %v205 = vadd.f32 %v198, %v204
          %206 = vset.pattern.permute.xlu0 3
          %207 = vperm.xlu0 %206, %v182
          %v208 = vpop.permute.xlu0 %207
          %vm209 = vcmp.eq.s32.totalorder %v208, %v184
          %v210 = vsel %vm209, 1, 0
          %v211 = vcvt.s32.f32 %v210
          %v212 = vadd.f32 %v205, %v211
          %v213 = vld [vmem:[%s1] sm:$0xff]
          %v214 = vld [vmem:[%s1 + $0x8] sm:$0xff]
          %v215 = vld [vmem:[%s1 + $0x10] sm:$0xff]
          %v216 = vld [vmem:[%s1 + $0x18] sm:$0xff]
          %v217 = vld [vmem:[%s1 + $0x20] sm:$0xff]
          %v218 = vld [vmem:[%s1 + $0x28] sm:$0xff]
          %v219 = vld [vmem:[%s1 + $0x30] sm:$0xff]
          %v220 = vld [vmem:[%s1 + $0x38] sm:$0xff]
          %v221 = vld [vmem:[%s1 + $0x40] sm:$0xff]
          %v222 = vld [vmem:[%s1 + $0x48] sm:$0xff]
          %v223 = vld [vmem:[%s1 + $0x50] sm:$0xff]
          %v224 = vld [vmem:[%s1 + $0x58] sm:$0xff]
          %v225 = vld [vmem:[%s1 + $0x60] sm:$0xff]
          %v226 = vld [vmem:[%s1 + $0x68] sm:$0xff]
          %v227 = vld [vmem:[%s1 + $0x70] sm:$0xff]
          %v228 = vld [vmem:[%s1 + $0x78] sm:$0xff]
          %229 = vmatprep.subr.mxu0 0.0
          %230 = vmatpush1.msra.mxu0 %v228
          %231 = vmatprep.subr.mxu0 0.0
          %232 = vmatpush1.msra.mxu0 %v227
          %233 = vmatprep.subr.mxu0 0.0
          %234 = vmatpush1.msra.mxu0 %v226
          %235 = vmatprep.subr.mxu0 0.0
          %236 = vmatpush1.msra.mxu0 %v225
          %237 = vmatprep.subr.mxu0 0.0
          %238 = vmatpush1.msra.mxu0 %v224
          %239 = vmatprep.subr.mxu0 0.0
          %240 = vmatpush1.msra.mxu0 %v223
          %241 = vmatprep.subr.mxu0 0.0
          %242 = vmatpush1.msra.mxu0 %v222
          %243 = vmatprep.subr.mxu0 0.0
          %244 = vmatpush1.msra.mxu0 %v221
          %245 = vmatprep.subr.mxu0 0.0
          %246 = vmatpush1.msra.mxu0 %v220
          %247 = vmatprep.subr.mxu0 0.0
          %248 = vmatpush1.msra.mxu0 %v219
          %249 = vmatprep.subr.mxu0 0.0
          %250 = vmatpush1.msra.mxu0 %v218
          %251 = vmatprep.subr.mxu0 0.0
          %252 = vmatpush1.msra.mxu0 %v217
          %253 = vmatprep.subr.mxu0 0.0
          %254 = vmatpush1.msra.mxu0 %v216
          %255 = vmatprep.subr.mxu0 0.0
          %256 = vmatpush1.msra.mxu0 %v215
          %257 = vmatprep.subr.mxu0 0.0
          %258 = vmatpush1.msra.mxu0 %v214
          %259 = vmatprep.subr.mxu0 0.0
          %260 = vmatpush1.msra.mxu0 %v213
          %261 = vmatprep.subr.mxu0 0.0
          %262 = vmatpush2.msra.mxu0 0.0
          %263 = vmatprep.subr.mxu0 0.0
          %264 = vmatpush2.msra.mxu0 0.0
          %265 = vmatprep.subr.mxu0 0.0
          %266 = vmatpush2.msra.mxu0 0.0
          %267 = vmatprep.subr.mxu0 0.0
          %268 = vmatpush2.msra.mxu0 0.0
          %269 = vmatprep.subr.mxu0 0.0
          %270 = vmatpush2.msra.mxu0 0.0
          %271 = vmatprep.subr.mxu0 0.0
          %272 = vmatpush2.msra.mxu0 0.0
          %273 = vmatprep.subr.mxu0 0.0
          %274 = vmatpush2.msra.mxu0 0.0
          %275 = vmatprep.subr.mxu0 0.0
          %276 = vmatpush2.msra.mxu0 0.0
          %277 = vmatprep.subr.mxu0 0.0
          %278 = vmatpush2.msra.mxu0 0.0
          %279 = vmatprep.subr.mxu0 0.0
          %280 = vmatpush2.msra.mxu0 0.0
          %281 = vmatprep.subr.mxu0 0.0
          %282 = vmatpush2.msra.mxu0 0.0
          %283 = vmatprep.subr.mxu0 0.0
          %284 = vmatpush2.msra.mxu0 0.0
          %285 = vmatprep.subr.mxu0 0.0
          %286 = vmatpush2.msra.mxu0 0.0
          %287 = vmatprep.subr.mxu0 0.0
          %288 = vmatpush2.msra.mxu0 0.0
          %289 = vmatprep.subr.mxu0 0.0
          %290 = vmatpush2.msra.mxu0 0.0
          %291 = vmatprep.subr.mxu0 0.0
          %292 = vmatpush2.msra.mxu0 0.0
          %293 = vmatprep.mubr.f32.mxu0 0.0
          %294 = vmatmul.mubr.f32.gmra.mxu0 %v212
          %v295 = vpop.f32.mrf.mxu0
          %v296 = vadd.f32 0.0, %v295
          %v297 = vpop.f32.mrf.mxu0
          %298 = vdwg.mxu0
          %v299 = vmul.f32 %v296, 0.25
          %vm300 = vcmask 261120
          %301 = vst.msk [vmem:[#allocation2] sm:$0xff] %vm300, %v299
          %vm302 = vcmask 7168
          %303 = vst.msk [vmem:[#allocation3] sm:$0xff] %vm302, -inf
          %304 = vst.msk [vmem:[#allocation4] sm:$0xff] %vm302, 0.0
        $region36: #{tpu_custom_call.1} parent=31 // pred_fallthru
          _
        %v305 = vld [vmem:[#allocation2] sm:$0xff]
        %v306 = vld [vmem:[%s174] sm:$0xff]
        %v307 = vld [vmem:[%s174 + $0x8] sm:$0xff]
        %v308 = vld [vmem:[%s174 + $0x10] sm:$0xff]
        %v309 = vld [vmem:[%s174 + $0x18] sm:$0xff]
        %v310 = vld [vmem:[%s174 + $0x20] sm:$0xff]
        %v311 = vld [vmem:[%s174 + $0x28] sm:$0xff]
        %v312 = vld [vmem:[%s174 + $0x30] sm:$0xff]
        %v313 = vld [vmem:[%s174 + $0x38] sm:$0xff]
        %v314 = vld [vmem:[%s174 + $0x40] sm:$0xff]
        %v315 = vld [vmem:[%s174 + $0x48] sm:$0xff]
        %v316 = vld [vmem:[%s174 + $0x50] sm:$0xff]
        %v317 = vld [vmem:[%s174 + $0x58] sm:$0xff]
        %v318 = vld [vmem:[%s174 + $0x60] sm:$0xff]
        %v319 = vld [vmem:[%s174 + $0x68] sm:$0xff]
        %v320 = vld [vmem:[%s174 + $0x70] sm:$0xff]
        %v321 = vld [vmem:[%s174 + $0x78] sm:$0xff]
        %vm322 = vcmask 261120
        %v324 = vsel %vm322, %v305, 0
        %v327 = vsel %vm322, %v306, 0
        %v330 = vsel %vm322, %v307, 0
        %v333 = vsel %vm322, %v308, 0
        %v336 = vsel %vm322, %v309, 0
        %v339 = vsel %vm322, %v310, 0
        %v342 = vsel %vm322, %v311, 0
        %v345 = vsel %vm322, %v312, 0
        %v348 = vsel %vm322, %v313, 0
        %v351 = vsel %vm322, %v314, 0
        %v354 = vsel %vm322, %v315, 0
        %v357 = vsel %vm322, %v316, 0
        %v360 = vsel %vm322, %v317, 0
        %v363 = vsel %vm322, %v318, 0
        %v366 = vsel %vm322, %v319, 0
        %v369 = vsel %vm322, %v320, 0
        %v372 = vsel %vm322, %v321, 0
        %374 = vmatprep.subr.mxu0 0.0
        %375 = vmatpush1.xpose.msra.mxu0 %v372
        %376 = vmatprep.subr.mxu0 0.0
        %377 = vmatpush1.xpose.msra.mxu0 %v369
        %378 = vmatprep.subr.mxu0 0.0
        %379 = vmatpush1.xpose.msra.mxu0 %v366
        %380 = vmatprep.subr.mxu0 0.0
        %381 = vmatpush1.xpose.msra.mxu0 %v363
        %382 = vmatprep.subr.mxu0 0.0
        %383 = vmatpush1.xpose.msra.mxu0 %v360
        %384 = vmatprep.subr.mxu0 0.0
        %385 = vmatpush1.xpose.msra.mxu0 %v357
        %386 = vmatprep.subr.mxu0 0.0
        %387 = vmatpush1.xpose.msra.mxu0 %v354
        %388 = vmatprep.subr.mxu0 0.0
        %389 = vmatpush1.xpose.msra.mxu0 %v351
        %390 = vmatprep.subr.mxu0 0.0
        %391 = vmatpush1.xpose.msra.mxu0 %v348
        %392 = vmatprep.subr.mxu0 0.0
        %393 = vmatpush1.xpose.msra.mxu0 %v345
        %394 = vmatprep.subr.mxu0 0.0
        %395 = vmatpush1.xpose.msra.mxu0 %v342
        %396 = vmatprep.subr.mxu0 0.0
        %397 = vmatpush1.xpose.msra.mxu0 %v339
        %398 = vmatprep.subr.mxu0 0.0
        %399 = vmatpush1.xpose.msra.mxu0 %v336
        %400 = vmatprep.subr.mxu0 0.0
        %401 = vmatpush1.xpose.msra.mxu0 %v333
        %402 = vmatprep.subr.mxu0 0.0
        %403 = vmatpush1.xpose.msra.mxu0 %v330
        %404 = vmatprep.subr.mxu0 0.0
        %405 = vmatpush1.xpose.msra.mxu0 %v327
        %406 = vmatprep.subr.mxu0 0.0
        %407 = vmatpush2.xpose.msra.mxu0 0.0
        %408 = vmatprep.subr.mxu0 0.0
        %409 = vmatpush2.xpose.msra.mxu0 0.0
        %410 = vmatprep.subr.mxu0 0.0
        %411 = vmatpush2.xpose.msra.mxu0 0.0
        %412 = vmatprep.subr.mxu0 0.0
        %413 = vmatpush2.xpose.msra.mxu0 0.0
        %414 = vmatprep.subr.mxu0 0.0
        %415 = vmatpush2.xpose.msra.mxu0 0.0
        %416 = vmatprep.subr.mxu0 0.0
        %417 = vmatpush2.xpose.msra.mxu0 0.0
        %418 = vmatprep.subr.mxu0 0.0
        %419 = vmatpush2.xpose.msra.mxu0 0.0
        %420 = vmatprep.subr.mxu0 0.0
        %421 = vmatpush2.xpose.msra.mxu0 0.0
        %422 = vmatprep.subr.mxu0 0.0
        %423 = vmatpush2.xpose.msra.mxu0 0.0
        %424 = vmatprep.subr.mxu0 0.0
        %425 = vmatpush2.xpose.msra.mxu0 0.0
        %426 = vmatprep.subr.mxu0 0.0
        %427 = vmatpush2.xpose.msra.mxu0 0.0
        %428 = vmatprep.subr.mxu0 0.0
        %429 = vmatpush2.xpose.msra.mxu0 0.0
        %430 = vmatprep.subr.mxu0 0.0
        %431 = vmatpush2.xpose.msra.mxu0 0.0
        %432 = vmatprep.subr.mxu0 0.0
        %433 = vmatpush2.xpose.msra.mxu0 0.0
        %434 = vmatprep.subr.mxu0 0.0
        %435 = vmatpush2.xpose.msra.mxu0 0.0
        %436 = vmatprep.subr.mxu0 0.0
        %437 = vmatpush2.xpose.msra.mxu0 0.0
        %438 = vmatprep.mubr.f32.mxu0 0.0
        %439 = vmatmul.mubr.f32.gmra.mxu0 %v324
        %v440 = vpop.f32.mrf.mxu0
        %v441 = vadd.f32 0.0, %v440
        %v442 = vpop.f32.mrf.mxu0
        %443 = vdwg.mxu0
        // Predicated region
        $region37: #{tpu_custom_call.1} parent=31 // pred_check
          %p444 = pneg %p176
        $region38: #{tpu_custom_call.1} parent=31 // pred_check_branch
          %446 = sbr.rel (%p444) target = $region40
        $region39: #{tpu_custom_call.1} parent=31 // pred_region
          %v447 = vld [vmem:[#allocation3] sm:$0xff]
          %448 = vmax.xlane.f32.xlu0 %v441
          %v449 = vpop.xlane.xlu0 %448
          %v450 = vmax.f32 %v447, %v449
          %v451 = vld [vmem:[#allocation4] sm:$0xff]
          %v452 = vsub.f32 %v447, %v450
          %v453 = vmul.f32 %v452, 1.442695
          %v454 = vpow.pop %v453
          %v455 = vmul.f32 %v451, %v454
          %457 = vset.pattern.permute.xlu0 0
          %458 = vperm.xlu0 %457, %v450
          %v459 = vpop.permute.xlu0 %458
          %v461 = vsub.f32 %v441, %v459
          %v462 = vmul.f32 %v461, 1.442695
          %v463 = vpow.pop %v462
          %464 = vadd.xlane.f32.xlu0 %v463
          %v465 = vpop.xlane.xlu0 %464
          %v466 = vadd.f32 %v455, %v465
          %vm467 = vcmask 7168
          %468 = vst.msk [vmem:[#allocation4] sm:$0xff] %vm467, %v466
          %469 = vst.msk [vmem:[#allocation3] sm:$0xff] %vm467, %v450
          %470 = vst [vmem:[#allocation5] sm:$0xff] %v441
        $region40: #{tpu_custom_call.1} parent=31 // pred_fallthru
          _
        %p471 = scmp.eq.s32.totalorder %s19, 1
        // Predicated region
        $region41: #{tpu_custom_call.1} parent=31 // pred_check
          %p472 = pneg %p471
        $region42: #{tpu_custom_call.1} parent=31 // pred_check_branch
          %474 = sbr.rel (%p472) target = $region44
        $region43: #{tpu_custom_call.1} parent=31 // pred_region
          %v475 = vld [vmem:[#allocation3] sm:$0xff]
          %477 = vset.pattern.permute.xlu0 0
          %478 = vperm.xlu0 %477, %v475
          %v479 = vpop.permute.xlu0 %478
          %v481 = vsub.f32 %v441, %v479
          %v482 = vld [vmem:[#allocation4] sm:$0xff]
          %v483 = vlog2.pop %v482
          %v484 = vmul.f32 %v483, 0.6931472
          %486 = vset.pattern.permute.xlu0 0
          %487 = vperm.xlu0 %486, %v484
          %v488 = vpop.permute.xlu0 %487
          %v490 = vsub.f32 %v481, %v488
          %491 = vst [vmem:[#allocation5] sm:$0xff] %v490
        $region44: #{tpu_custom_call.1} parent=31 // pred_fallthru
          _
        // Predicated region
        $region45: #{tpu_custom_call.1} parent=31 // pred_check
          %p492 = pneg %p113
        $region46: #{tpu_custom_call.1} parent=31 // pred_check_branch
          %494 = sbr.rel (%p492) target = $region48
        $region47: #{tpu_custom_call.1} parent=31 // pred_region
          %s496 = ssub.s32 128, 128
          %497 = vsyncadd [#allocation6], %s496
          %s498 = smul.addr %s20, 128
          %s499 = scalar_lea.hbm %s3, %s498
          %s501 = sshll.u32 [#allocation5], 4
          %s502 = int_to_ptr.vmem [resolvable:$true] %s501
          %504 = dma.vmem_to_hbm [thread:$0]  %s502, 128, %s499, [#allocation6]
        $region48: #{tpu_custom_call.1} parent=31 // pred_fallthru
          _
        // Predicated region
        $region49: #{tpu_custom_call.1} parent=31 // pred_check
          %p505 = pneg %p113
        $region50: #{tpu_custom_call.1} parent=31 // pred_check_branch
          %507 = sbr.rel (%p505) target = $region52
        $region51: #{tpu_custom_call.1} parent=31 // pred_region
          %508 = dma.done [#allocation6], 128
        $region52: #{tpu_custom_call.1} parent=31 // pred_fallthru
          _
      $region32: #{tpu_custom_call.1} parent=5 // pred_fallthru
        _
      %p509 = scmp.le.s32.totalorder 2, %s10
      // Predicated region
      $region53: #{tpu_custom_call.1} parent=5 // pred_check
        %p510 = pneg %p509
      $region54: #{tpu_custom_call.1} parent=5 // pred_check_branch
        %512 = sbr.rel (%p510) target = $region56
      $region55: #{tpu_custom_call.1} parent=5 // pred_region
        %s513 = ssub.s32 %s10, 2
      $region56: #{tpu_custom_call.1} parent=5 // pred_fallthru
        _
    $region6: #{tpu_custom_call.1} parent=1 // loop_footer
      %s14 = sadd.s32 1, %s10
    $region7: #{tpu_custom_call.1} parent=1 // loop_footer_branch
      %9 = sbr.rel target = $region3
    $region8: #{tpu_custom_call.1} parent=1 // loop_exit
      _
    %514 = vsyncpa [#allocation6], 1
    %s515 = scalar_lea.sflag [#allocation6], 1
    %516 = vsyncpa %s515, 1

</llo_original>
